<compile_context>
chip_gen: v6e
topology: v6e:2x2x1
jax: 0.10.0
libtpu: 0.0.40
codegen_flags: <defaults>
</compile_context>

<pallas_src>
import math
import numpy as np
import jax
import jax.numpy as jnp
from jax.experimental import pallas as pl
from jax.experimental.pallas import tpu as pltpu

SCORE_THRESH = 0.05
WX, WY, WW, WH = 10.0, 10.0, 5.0, 5.0                 # BoxCoder weights
INV_WX, INV_WY, INV_WW, INV_WH = 1.0 / WX, 1.0 / WY, 1.0 / WW, 1.0 / WH
BBOX_XFORM_CLIP = math.log(1000.0 / 16.0)             # dw/dh clamp


def postprocessor_kernel(scalars_ref,    # SMEM (3B,) int32: [W0, H0, n0, W1, H1, n1, ...]
                         logits_ref,     # VMEM (TR, C)   proposal-major class logits
                         deltas_ref,     # VMEM (TR, 4C)  interleaved: col 4j+k = coord k of class j
                         boxes_ref,      # VMEM (TR, 4)   reference proposals, xyxy
                         prob_ref,       # out  (TR, C)   class probabilities (padded rows = 0)
                         pred_ref):      # out  (TR, 4C)  decoded + clipped boxes, PyTorch layout
    b = pl.program_id(0)
    r = pl.program_id(1)
    TR, C = logits_ref.shape
    C4 = pred_ref.shape[-1]

    # Per-image scalars (read once per block).
    w_img = scalars_ref[3 * b].astype(jnp.float32)
    h_img = scalars_ref[3 * b + 1].astype(jnp.float32)
    n_valid = scalars_ref[3 * b + 2]
    x_max = w_img - 1.0
    y_max = h_img - 1.0

    # Valid-row mask (proposals live on the sublane axis).  Padded / out-of-range rows are
    # zeroed so the batched outputs can be consumed without any [:R] slicing downstream.
    row_ids = jax.lax.broadcasted_iota(jnp.int32, (TR, 1), 0) + r * TR
    valid = row_ids < n_valid                                  # (TR, 1)

    # ---- softmax(class_logits, -1): classes are on the lane axis ----
    x = logits_ref[...].astype(jnp.float32)                    # (TR, C)
    m = jnp.max(x, axis=-1, keepdims=True)
    e = jnp.exp(x - m)
    inv_den = pl.reciprocal(jnp.sum(e, axis=-1, keepdims=True), approx=True)  # EUP slot
    prob = e * inv_den
    prob_ref[...] = jnp.where(valid, prob, 0.0).astype(prob_ref.dtype)

    # ---- proposal geometry (single narrow (TR, 4) stream) ----
    bx = boxes_ref[...].astype(jnp.float32)                    # (TR, 4) xyxy
    widths = bx[:, 2:3] - bx[:, 0:1] + 1.0                     # (TR, 1)
    heights = bx[:, 3:4] - bx[:, 1:2] + 1.0
    ctr_x = bx[:, 0:1] + 0.5 * widths
    ctr_y = bx[:, 1:2] + 0.5 * heights

    # ---- per-lane coordinate-slot patterns: k = lane % 4 ∈ {dx, dy, dw, dh} ----
    k_mod = jax.lax.broadcasted_iota(jnp.int32, (1, C4), 1) % 4
    is_xy = k_mod < 2                                          # dx/dy slots (→ x1/y1 outputs)
    is_x = (k_mod % 2) == 0                                    # x-coordinate slots (k = 0, 2)
    inv_w = jnp.where(is_xy,
                      jnp.where(is_x, INV_WX, INV_WY),
                      jnp.where(is_x, INV_WW, INV_WH)).astype(jnp.float32)

    # ---- BoxCoder.decode directly in the interleaved (TR, 4C) layout ----
    # The whole deltas block is consumed as-is: no wrapper transpose, no per-coordinate temps.
    t = deltas_ref[...].astype(jnp.float32) * inv_w            # scaled deltas
    t_m2 = pltpu.roll(t, 2, 1)                                 # t_m2[:, i] = t[:, i-2]  (dx/dy for x2/y2)
    t_p2 = pltpu.roll(t, C4 - 2, 1)                            # t_p2[:, i] = t[:, i+2]  (dw/dh for x1/y1)
    # Wrapped lanes from the circular rolls are never selected by the is_xy masks below.

    lin = jnp.where(is_xy, t, t_m2)                            # dx or dy aligned to every slot
    size = jnp.exp(jnp.minimum(jnp.where(is_xy, t_p2, t), BBOX_XFORM_CLIP))  # exp(clamped dw/dh)

    wh = jnp.where(is_x, widths, heights)                      # (TR, C4) lane select of broadcasts
    ctr = jnp.where(is_x, ctr_x, ctr_y)
    half = jnp.where(is_xy, -0.5, 0.5)                         # x1/y1: -0.5*size ; x2/y2: +0.5*size
    off = jnp.where(is_xy, 0.0, -1.0)                          # x2/y2 carry the extra "-1"
    cmax = jnp.where(is_x, x_max, y_max)

    pred = ctr + lin * wh + half * (size * wh) + off
    pred = jnp.clip(pred, 0.0, cmax)                           # clip_to_image(remove_empty=False)
    pred_ref[...] = jnp.where(valid, pred, 0.0).astype(pred_ref.dtype)

    # TODO(synk): per-class NMS and kthvalue-based max_detections_per_img trimming are
    # data-dependent / dynamic-shape; not expressible as a static Pallas kernel.


def _choose_row_tile(B, R, C, vmem_budget_bytes=24 << 20):
    """Pick the proposal-row tile: whole image per grid step when it fits VMEM."""
    # Five f32 streams per row (logits C, deltas 4C, boxes 4, prob C, pred 4C), double-buffered.
    bytes_per_row = 4 * (10 * C + 4)
    cap = (vmem_budget_bytes // (2 * bytes_per_row)) // 8 * 8
    cap = int(max(8, min(cap, 8192)))
    if R <= cap:
        if B >= 2 or R <= 8:
            return R                                   # one whole image per grid step
        # B == 1: split rows into two tiles so both v7x TensorCores get work.
        return max(8, 8 * ((R + 15) // 16))
    return cap


def post_processor_forward(class_logits, box_regression, features, concat_boxes,
                           image_sizes, B, R, *, score_dtype=jnp.float32,
                           vmem_budget_bytes=24 << 20):
    """Run the fused PostProcessor hot path; outputs stay in the PyTorch proposal-major layout."""
    N, C = class_logits.shape
    assert N == B * R
    C4 = box_regression.shape[-1]
    assert C4 == 4 * C

    # Free, layout-preserving reshapes only (leading-dim split): NO transposes, NO pads.
    logits_b = class_logits.reshape(B, R, C)
    deltas_b = box_regression.reshape(B, R, C4)
    boxes_b = concat_boxes.reshape(B, R, 4)

    TR = _choose_row_tile(B, R, C, vmem_budget_bytes)
    grid = (B, pl.cdiv(R, TR))

    # Scalar prefetch: [W, H, num_valid] per image (image_sizes rows are (W, H)).
    sizes = jnp.asarray(image_sizes, jnp.int32).reshape(B, 2)
    counts = jnp.full((B, 1), R, jnp.int32)
    scalars = jnp.concatenate([sizes, counts], axis=1).reshape(-1)   # (3B,)

    grid_spec = pltpu.PrefetchScalarGridSpec(
        num_scalar_prefetch=1,
        grid=grid,
        in_specs=[
            pl.BlockSpec((None, TR, C), lambda b, r, sz: (b, r, 0)),    # class logits
            pl.BlockSpec((None, TR, C4), lambda b, r, sz: (b, r, 0)),   # interleaved deltas
            pl.BlockSpec((None, TR, 4), lambda b, r, sz: (b, r, 0)),    # proposal boxes
        ],
        out_specs=[
            pl.BlockSpec((None, TR, C), lambda b, r, sz: (b, r, 0)),    # class prob
            pl.BlockSpec((None, TR, C4), lambda b, r, sz: (b, r, 0)),   # decoded boxes
        ],
    )
    out_shapes = (
        jax.ShapeDtypeStruct((B, R, C), score_dtype),
        jax.ShapeDtypeStruct((B, R, C4), jnp.float32),
    )
    prob, pred_boxes = pl.pallas_call(
        postprocessor_kernel,
        out_shape=out_shapes,
        grid_spec=grid_spec,
        compiler_params=pltpu.CompilerParams(
            dimension_semantics=("parallel", "parallel"),
            vmem_limit_bytes=32 * 1024 * 1024,
        ),
    )(scalars, logits_b, deltas_b, boxes_b)

    # Per-image results reference the SHARED batched arrays (no per-image HBM slice copies).
    # Invalid / padded proposal rows already have score 0 (< SCORE_THRESH) and zero boxes,
    # so the downstream NMS / top-k consumer can read the padded arrays directly.
    feat = features.reshape(B, R, -1)
    results = []
    for b in range(B):
        results.append({
            "image_index": b,
            "boxes": pred_boxes,          # (B, R, 4C) interleaved xyxy (PyTorch layout), shared
            "scores": prob,               # (B, R, C), shared
            "features": feat,             # (B, R, F), shared view
            "image_sizes": sizes,         # (B, 2) (W, H), shared
            "num_valid": R,
            "score_thresh": SCORE_THRESH,
        })
    return results, prob, pred_boxes


def reference_jax(class_logits, box_regression, concat_boxes, image_sizes, B, R):
    """Pure-JAX reference of the fused hot path (PyTorch-layout outputs)."""
    C = class_logits.shape[-1]
    prob = jax.nn.softmax(class_logits, axis=-1)
    w = concat_boxes[:, 2] - concat_boxes[:, 0] + 1.0
    h = concat_boxes[:, 3] - concat_boxes[:, 1] + 1.0
    cx = concat_boxes[:, 0] + 0.5 * w
    cy = concat_boxes[:, 1] + 0.5 * h
    d = box_regression.reshape(-1, C, 4)
    dx = d[..., 0] / WX
    dy = d[..., 1] / WY
    dw = jnp.minimum(d[..., 2] / WW, BBOX_XFORM_CLIP)
    dh = jnp.minimum(d[..., 3] / WH, BBOX_XFORM_CLIP)
    pcx = dx * w[:, None] + cx[:, None]
    pcy = dy * h[:, None] + cy[:, None]
    pw = jnp.exp(dw) * w[:, None]
    ph = jnp.exp(dh) * h[:, None]
    boxes = jnp.stack([pcx - 0.5 * pw, pcy - 0.5 * ph,
                       pcx + 0.5 * pw - 1.0, pcy + 0.5 * ph - 1.0], axis=-1)   # (N, C, 4)
    boxes = boxes.reshape(B, R, C, 4)
    Wc = image_sizes[:, 0].astype(jnp.float32)[:, None, None]
    Hc = image_sizes[:, 1].astype(jnp.float32)[:, None, None]
    boxes = jnp.stack([jnp.clip(boxes[..., 0], 0.0, Wc - 1.0),
                       jnp.clip(boxes[..., 1], 0.0, Hc - 1.0),
                       jnp.clip(boxes[..., 2], 0.0, Wc - 1.0),
                       jnp.clip(boxes[..., 3], 0.0, Hc - 1.0)], axis=-1)
    return prob.reshape(B, R, C), boxes.reshape(B, R, 4 * C)


if __name__ == "__main__":
    # 2 images, 16 proposals each, 32 classes (4*C = 128 lanes), 32-d features.
    B, R, C, F = 2, 16, 32, 32
    key = jax.random.PRNGKey(0)
    k1, k2, k3, k4, k5 = jax.random.split(key, 5)

    class_logits = jax.random.normal(k1, (B * R, C), jnp.float32)
    box_regression = 0.5 * jax.random.normal(k2, (B * R, 4 * C), jnp.float32)
    xy = jax.random.uniform(k3, (B * R, 2), jnp.float32, 0.0, 60.0)
    wh = jax.random.uniform(k4, (B * R, 2), jnp.float32, 5.0, 40.0)
    concat_boxes = jnp.concatenate([xy, xy + wh], axis=-1)            # valid xyxy proposals
    features = jax.random.normal(k5, (B * R, F), jnp.float32)
    image_sizes = jnp.array([[100, 120], [96, 80]], dtype=jnp.int32)  # (W, H) per image

    results, prob, pred_boxes = post_processor_forward(
        class_logits, box_regression, features, concat_boxes, image_sizes, B, R)
    jax.block_until_ready((prob, pred_boxes))

    ref_prob, ref_boxes = reference_jax(class_logits, box_regression, concat_boxes,
                                        image_sizes, B, R)
    np.testing.assert_allclose(np.asarray(prob), np.asarray(ref_prob),
                               rtol=5e-3, atol=1e-5)       # approx softmax reciprocal
    np.testing.assert_allclose(np.asarray(pred_boxes), np.asarray(ref_boxes),
                               rtol=1e-4, atol=1e-3)
    print("KERNEL_OK")
</pallas_src>

<mosaic_0001>
module attributes {stable_mosaic.version = 11 : i64} {
  func.func @postprocessor_kernel(%arg0: i32, %arg1: i32, %arg2: memref<6xi32, #tpu.memory_space<smem>>, %arg3: memref<1x16x32xf32, #tpu.memory_space<vmem>>, %arg4: memref<1x16x128xf32, #tpu.memory_space<vmem>>, %arg5: memref<1x16x4xf32, #tpu.memory_space<vmem>>, %arg6: memref<1x16x32xf32, #tpu.memory_space<vmem>>, %arg7: memref<1x16x128xf32, #tpu.memory_space<vmem>>) attributes {dimension_semantics = [#tpu.dimension_semantics<parallel>, #tpu.dimension_semantics<parallel>], iteration_bounds = array<i64: 2, 1>, scalar_prefetch = 1 : i64, scratch_operands = 0 : i64, tpu.core_type = #tpu.core_type<tc>, window_params = [{transform_indices = @transform_0, window_bounds = array<i64: 1, 16, 32>}, {transform_indices = @transform_1, window_bounds = array<i64: 1, 16, 128>}, {transform_indices = @transform_2, window_bounds = array<i64: 1, 16, 4>}, {transform_indices = @transform_3, window_bounds = array<i64: 1, 16, 32>}, {transform_indices = @transform_4, window_bounds = array<i64: 1, 16, 128>}]} {
    %c3_i32 = arith.constant 3 : i32
    %0 = arith.muli %c3_i32, %arg0 : i32
    %1 = arith.index_cast %0 : i32 to index
    %2 = memref.load %arg2[%1] : memref<6xi32, #tpu.memory_space<smem>>
    %3 = arith.sitofp %2 : i32 to f32
    %c3_i32_0 = arith.constant 3 : i32
    %4 = arith.muli %c3_i32_0, %arg0 : i32
    %c1_i32 = arith.constant 1 : i32
    %5 = arith.addi %4, %c1_i32 : i32
    %6 = arith.index_cast %5 : i32 to index
    %7 = memref.load %arg2[%6] : memref<6xi32, #tpu.memory_space<smem>>
    %8 = arith.sitofp %7 : i32 to f32
    %c3_i32_1 = arith.constant 3 : i32
    %9 = arith.muli %c3_i32_1, %arg0 : i32
    %c2_i32 = arith.constant 2 : i32
    %10 = arith.addi %9, %c2_i32 : i32
    %11 = arith.index_cast %10 : i32 to index
    %12 = memref.load %arg2[%11] : memref<6xi32, #tpu.memory_space<smem>>
    %cst = arith.constant 1.000000e+00 : f32
    %13 = arith.subf %3, %cst : f32
    %cst_2 = arith.constant 1.000000e+00 : f32
    %14 = arith.subf %8, %cst_2 : f32
    %15 = tpu.iota {dimensions = array<i32: 0>} : vector<16x1xi32>
    %c16_i32 = arith.constant 16 : i32
    %16 = arith.muli %arg1, %c16_i32 : i32
    %17 = vector.broadcast %16 : i32 to vector<16x1xi32>
    %18 = arith.addi %15, %17 : vector<16x1xi32>
    %19 = vector.broadcast %12 : i32 to vector<16x1xi32>
    %20 = arith.cmpi slt, %18, %19 : vector<16x1xi32>
    %c0 = arith.constant 0 : index
    %c0_3 = arith.constant 0 : index
    %c0_4 = arith.constant 0 : index
    %21 = vector.load %arg3[%c0, %c0_3, %c0_4] : memref<1x16x32xf32, #tpu.memory_space<vmem>>, vector<1x16x32xf32>
    %22 = vector.shape_cast %21 : vector<1x16x32xf32> to vector<16x32xf32>
    %cst_5 = arith.constant dense<0xFF800000> : vector<16xf32>
    %23 = vector.multi_reduction <maximumf>, %22, %cst_5 [1] : vector<16x32xf32> to vector<16xf32>
    %24 = vector.shape_cast %23 : vector<16xf32> to vector<16x1xf32>
    %25 = vector.broadcast %24 : vector<16x1xf32> to vector<16x32xf32>
    %26 = arith.subf %22, %25 : vector<16x32xf32>
    %27 = math.exp %26 : vector<16x32xf32>
    %cst_6 = arith.constant dense<0.000000e+00> : vector<16xf32>
    %28 = vector.multi_reduction <add>, %27, %cst_6 [1] : vector<16x32xf32> to vector<16xf32>
    %29 = vector.shape_cast %28 : vector<16xf32> to vector<16x1xf32>
    %30 = tpu.reciprocal %29 {approx = true} : vector<16x1xf32> -> vector<16x1xf32>
    %31 = vector.broadcast %30 : vector<16x1xf32> to vector<16x32xf32>
    %32 = arith.mulf %27, %31 : vector<16x32xf32>
    %cst_7 = arith.constant 0.000000e+00 : f32
    %33 = vector.shape_cast %20 : vector<16x1xi1> to vector<16x1xi1>
    %34 = vector.broadcast %33 : vector<16x1xi1> to vector<16x32xi1>
    %35 = vector.broadcast %cst_7 : f32 to vector<16x32xf32>
    %36 = arith.select %34, %32, %35 : vector<16x32xi1>, vector<16x32xf32>
    %c0_8 = arith.constant 0 : index
    %c0_9 = arith.constant 0 : index
    %c0_10 = arith.constant 0 : index
    %37 = vector.load %arg6[%c0_8, %c0_9, %c0_10] : memref<1x16x32xf32, #tpu.memory_space<vmem>>, vector<1x16x32xf32>
    %38 = vector.shape_cast %37 : vector<1x16x32xf32> to vector<16x32xf32>
    %39 = vector.shape_cast %36 : vector<16x32xf32> to vector<1x16x32xf32>
    tpu.vector_store %arg6[%c0_8, %c0_9, %c0_10], %39 {strides = array<i32>} : memref<1x16x32xf32, #tpu.memory_space<vmem>>, vector<1x16x32xf32>,
    %c0_11 = arith.constant 0 : index
    %c0_12 = arith.constant 0 : index
    %c0_13 = arith.constant 0 : index
    %40 = vector.load %arg5[%c0_11, %c0_12, %c0_13] : memref<1x16x4xf32, #tpu.memory_space<vmem>>, vector<1x16x4xf32>
    %41 = vector.shape_cast %40 : vector<1x16x4xf32> to vector<16x4xf32>
    %42 = vector.extract_strided_slice %41 {offsets = [0, 2], sizes = [16, 1], strides = [1, 1]} : vector<16x4xf32> to vector<16x1xf32>
    %43 = vector.extract_strided_slice %41 {offsets = [0, 0], sizes = [16, 1], strides = [1, 1]} : vector<16x4xf32> to vector<16x1xf32>
    %44 = arith.subf %42, %43 : vector<16x1xf32>
    %cst_14 = arith.constant 1.000000e+00 : f32
    %45 = vector.broadcast %cst_14 : f32 to vector<16x1xf32>
    %46 = arith.addf %44, %45 : vector<16x1xf32>
    %47 = vector.extract_strided_slice %41 {offsets = [0, 3], sizes = [16, 1], strides = [1, 1]} : vector<16x4xf32> to vector<16x1xf32>
    %48 = vector.extract_strided_slice %41 {offsets = [0, 1], sizes = [16, 1], strides = [1, 1]} : vector<16x4xf32> to vector<16x1xf32>
    %49 = arith.subf %47, %48 : vector<16x1xf32>
    %cst_15 = arith.constant 1.000000e+00 : f32
    %50 = vector.broadcast %cst_15 : f32 to vector<16x1xf32>
    %51 = arith.addf %49, %50 : vector<16x1xf32>
    %52 = vector.extract_strided_slice %41 {offsets = [0, 0], sizes = [16, 1], strides = [1, 1]} : vector<16x4xf32> to vector<16x1xf32>
    %cst_16 = arith.constant 5.000000e-01 : f32
    %53 = vector.broadcast %cst_16 : f32 to vector<16x1xf32>
    %54 = arith.mulf %53, %46 : vector<16x1xf32>
    %55 = arith.addf %52, %54 : vector<16x1xf32>
    %56 = vector.extract_strided_slice %41 {offsets = [0, 1], sizes = [16, 1], strides = [1, 1]} : vector<16x4xf32> to vector<16x1xf32>
    %cst_17 = arith.constant 5.000000e-01 : f32
    %57 = vector.broadcast %cst_17 : f32 to vector<16x1xf32>
    %58 = arith.mulf %57, %51 : vector<16x1xf32>
    %59 = arith.addf %56, %58 : vector<16x1xf32>
    %60 = tpu.iota {dimensions = array<i32: 1>} : vector<1x128xi32>
    %c4_i32 = arith.constant 4 : i32
    %c0_i32 = arith.constant 0 : i32
    %61 = arith.cmpi eq, %c4_i32, %c0_i32 : i32
    %c1_i32_18 = arith.constant 1 : i32
    %62 = arith.select %61, %c1_i32_18, %c4_i32 : i32
    %63 = vector.broadcast %62 : i32 to vector<1x128xi32>
    %64 = arith.remsi %60, %63 : vector<1x128xi32>
    %c0_i32_19 = arith.constant 0 : i32
    %65 = vector.broadcast %c0_i32_19 : i32 to vector<1x128xi32>
    %66 = arith.cmpi ne, %64, %65 : vector<1x128xi32>
    %c0_i32_20 = arith.constant 0 : i32
    %67 = vector.broadcast %c0_i32_20 : i32 to vector<1x128xi32>
    %68 = arith.cmpi slt, %64, %67 : vector<1x128xi32>
    %c0_i32_21 = arith.constant 0 : i32
    %69 = arith.cmpi slt, %62, %c0_i32_21 : i32
    %70 = vector.broadcast %69 : i1 to vector<1x128xi1>
    %71 = vector.broadcast %70 : vector<1x128xi1> to vector<1x128xi1>
    %72 = arith.xori %68, %71 : vector<1x128xi1>
    %73 = arith.andi %72, %66 : vector<1x128xi1>
    %74 = vector.broadcast %62 : i32 to vector<1x128xi32>
    %75 = arith.addi %64, %74 : vector<1x128xi32>
    %76 = arith.select %73, %75, %64 : vector<1x128xi1>, vector<1x128xi32>
    %c2_i32_22 = arith.constant 2 : i32
    %77 = vector.broadcast %c2_i32_22 : i32 to vector<1x128xi32>
    %78 = arith.cmpi slt, %76, %77 : vector<1x128xi32>
    %c2_i32_23 = arith.constant 2 : i32
    %c0_i32_24 = arith.constant 0 : i32
    %79 = arith.cmpi eq, %c2_i32_23, %c0_i32_24 : i32
    %c1_i32_25 = arith.constant 1 : i32
    %80 = arith.select %79, %c1_i32_25, %c2_i32_23 : i32
    %81 = vector.broadcast %80 : i32 to vector<1x128xi32>
    %82 = arith.remsi %76, %81 : vector<1x128xi32>
    %c0_i32_26 = arith.constant 0 : i32
    %83 = vector.broadcast %c0_i32_26 : i32 to vector<1x128xi32>
    %84 = arith.cmpi ne, %82, %83 : vector<1x128xi32>
    %c0_i32_27 = arith.constant 0 : i32
    %85 = vector.broadcast %c0_i32_27 : i32 to vector<1x128xi32>
    %86 = arith.cmpi slt, %82, %85 : vector<1x128xi32>
    %c0_i32_28 = arith.constant 0 : i32
    %87 = arith.cmpi slt, %80, %c0_i32_28 : i32
    %88 = vector.broadcast %87 : i1 to vector<1x128xi1>
    %89 = vector.broadcast %88 : vector<1x128xi1> to vector<1x128xi1>
    %90 = arith.xori %86, %89 : vector<1x128xi1>
    %91 = arith.andi %90, %84 : vector<1x128xi1>
    %92 = vector.broadcast %80 : i32 to vector<1x128xi32>
    %93 = arith.addi %82, %92 : vector<1x128xi32>
    %94 = arith.select %91, %93, %82 : vector<1x128xi1>, vector<1x128xi32>
    %c0_i32_29 = arith.constant 0 : i32
    %95 = vector.broadcast %c0_i32_29 : i32 to vector<1x128xi32>
    %96 = arith.cmpi eq, %94, %95 : vector<1x128xi32>
    %cst_30 = arith.constant 1.000000e-01 : f32
    %cst_31 = arith.constant 1.000000e-01 : f32
    %97 = vector.broadcast %cst_30 : f32 to vector<1x128xf32>
    %98 = vector.broadcast %cst_31 : f32 to vector<1x128xf32>
    %99 = arith.select %96, %97, %98 : vector<1x128xi1>, vector<1x128xf32>
    %cst_32 = arith.constant 2.000000e-01 : f32
    %cst_33 = arith.constant 2.000000e-01 : f32
    %100 = vector.broadcast %cst_32 : f32 to vector<1x128xf32>
    %101 = vector.broadcast %cst_33 : f32 to vector<1x128xf32>
    %102 = arith.select %96, %100, %101 : vector<1x128xi1>, vector<1x128xf32>
    %103 = arith.select %78, %99, %102 : vector<1x128xi1>, vector<1x128xf32>
    %c0_34 = arith.constant 0 : index
    %c0_35 = arith.constant 0 : index
    %c0_36 = arith.constant 0 : index
    %104 = vector.load %arg4[%c0_34, %c0_35, %c0_36] : memref<1x16x128xf32, #tpu.memory_space<vmem>>, vector<1x16x128xf32>
    %105 = vector.shape_cast %104 : vector<1x16x128xf32> to vector<16x128xf32>
    %106 = vector.broadcast %103 : vector<1x128xf32> to vector<16x128xf32>
    %107 = arith.mulf %105, %106 : vector<16x128xf32>
    %c2_i32_37 = arith.constant 2 : i32
    %108 = tpu.dynamic_rotate %107 by %c2_i32_37 dim 1 : vector<16x128xf32>, i32 -> vector<16x128xf32>
    %c126_i32 = arith.constant 126 : i32
    %109 = tpu.dynamic_rotate %107 by %c126_i32 dim 1 : vector<16x128xf32>, i32 -> vector<16x128xf32>
    %110 = vector.shape_cast %78 : vector<1x128xi1> to vector<1x128xi1>
    %111 = vector.broadcast %110 : vector<1x128xi1> to vector<16x128xi1>
    %112 = arith.select %111, %107, %108 : vector<16x128xi1>, vector<16x128xf32>
    %113 = vector.shape_cast %78 : vector<1x128xi1> to vector<1x128xi1>
    %114 = vector.broadcast %113 : vector<1x128xi1> to vector<16x128xi1>
    %115 = arith.select %114, %109, %107 : vector<16x128xi1>, vector<16x128xf32>
    %cst_38 = arith.constant 4.13516665 : f32
    %116 = vector.broadcast %cst_38 : f32 to vector<16x128xf32>
    %117 = arith.minimumf %115, %116 : vector<16x128xf32>
    %118 = math.exp %117 : vector<16x128xf32>
    %119 = vector.shape_cast %96 : vector<1x128xi1> to vector<1x128xi1>
    %120 = vector.broadcast %119 : vector<1x128xi1> to vector<16x128xi1>
    %121 = vector.shape_cast %46 : vector<16x1xf32> to vector<16x1xf32>
    %122 = vector.broadcast %121 : vector<16x1xf32> to vector<16x128xf32>
    %123 = vector.shape_cast %51 : vector<16x1xf32> to vector<16x1xf32>
    %124 = vector.broadcast %123 : vector<16x1xf32> to vector<16x128xf32>
    %125 = arith.select %120, %122, %124 : vector<16x128xi1>, vector<16x128xf32>
    %126 = vector.shape_cast %96 : vector<1x128xi1> to vector<1x128xi1>
    %127 = vector.broadcast %126 : vector<1x128xi1> to vector<16x128xi1>
    %128 = vector.shape_cast %55 : vector<16x1xf32> to vector<16x1xf32>
    %129 = vector.broadcast %128 : vector<16x1xf32> to vector<16x128xf32>
    %130 = vector.shape_cast %59 : vector<16x1xf32> to vector<16x1xf32>
    %131 = vector.broadcast %130 : vector<16x1xf32> to vector<16x128xf32>
    %132 = arith.select %127, %129, %131 : vector<16x128xi1>, vector<16x128xf32>
    %cst_39 = arith.constant -5.000000e-01 : f32
    %cst_40 = arith.constant 5.000000e-01 : f32
    %133 = vector.broadcast %cst_39 : f32 to vector<1x128xf32>
    %134 = vector.broadcast %cst_40 : f32 to vector<1x128xf32>
    %135 = arith.select %78, %133, %134 : vector<1x128xi1>, vector<1x128xf32>
    %cst_41 = arith.constant 0.000000e+00 : f32
    %cst_42 = arith.constant -1.000000e+00 : f32
    %136 = vector.broadcast %cst_41 : f32 to vector<1x128xf32>
    %137 = vector.broadcast %cst_42 : f32 to vector<1x128xf32>
    %138 = arith.select %78, %136, %137 : vector<1x128xi1>, vector<1x128xf32>
    %139 = vector.broadcast %13 : f32 to vector<1x128xf32>
    %140 = vector.broadcast %14 : f32 to vector<1x128xf32>
    %141 = arith.select %96, %139, %140 : vector<1x128xi1>, vector<1x128xf32>
    %142 = arith.mulf %112, %125 : vector<16x128xf32>
    %143 = arith.addf %132, %142 : vector<16x128xf32>
    %144 = arith.mulf %118, %125 : vector<16x128xf32>
    %145 = vector.broadcast %135 : vector<1x128xf32> to vector<16x128xf32>
    %146 = arith.mulf %145, %144 : vector<16x128xf32>
    %147 = arith.addf %143, %146 : vector<16x128xf32>
    %148 = vector.broadcast %138 : vector<1x128xf32> to vector<16x128xf32>
    %149 = arith.addf %147, %148 : vector<16x128xf32>
    %cst_43 = arith.constant 0.000000e+00 : f32
    %150 = vector.broadcast %cst_43 : f32 to vector<16x128xf32>
    %151 = arith.maximumf %150, %149 : vector<16x128xf32>
    %152 = vector.broadcast %141 : vector<1x128xf32> to vector<16x128xf32>
    %153 = arith.minimumf %152, %151 : vector<16x128xf32>
    %cst_44 = arith.constant 0.000000e+00 : f32
    %154 = vector.shape_cast %20 : vector<16x1xi1> to vector<16x1xi1>
    %155 = vector.broadcast %154 : vector<16x1xi1> to vector<16x128xi1>
    %156 = vector.broadcast %cst_44 : f32 to vector<16x128xf32>
    %157 = arith.select %155, %153, %156 : vector<16x128xi1>, vector<16x128xf32>
    %c0_45 = arith.constant 0 : index
    %c0_46 = arith.constant 0 : index
    %c0_47 = arith.constant 0 : index
    %158 = vector.load %arg7[%c0_45, %c0_46, %c0_47] : memref<1x16x128xf32, #tpu.memory_space<vmem>>, vector<1x16x128xf32>
    %159 = vector.shape_cast %158 : vector<1x16x128xf32> to vector<16x128xf32>
    %160 = vector.shape_cast %157 : vector<16x128xf32> to vector<1x16x128xf32>
    tpu.vector_store %arg7[%c0_45, %c0_46, %c0_47], %160 {strides = array<i32>} : memref<1x16x128xf32, #tpu.memory_space<vmem>>, vector<1x16x128xf32>,
    return
  }
  func.func @transform_0(%arg0: i32, %arg1: i32, %arg2: memref<6xi32, #tpu.memory_space<smem>>) -> (i32, i32, i32) {
    %c0_i32 = arith.constant 0 : i32
    %c0_i32_0 = arith.constant 0 : i32
    return %arg0, %arg1, %c0_i32 : i32, i32, i32
  }
  func.func @transform_1(%arg0: i32, %arg1: i32, %arg2: memref<6xi32, #tpu.memory_space<smem>>) -> (i32, i32, i32) {
    %c0_i32 = arith.constant 0 : i32
    %c0_i32_0 = arith.constant 0 : i32
    return %arg0, %arg1, %c0_i32 : i32, i32, i32
  }
  func.func @transform_2(%arg0: i32, %arg1: i32, %arg2: memref<6xi32, #tpu.memory_space<smem>>) -> (i32, i32, i32) {
    %c0_i32 = arith.constant 0 : i32
    %c0_i32_0 = arith.constant 0 : i32
    return %arg0, %arg1, %c0_i32 : i32, i32, i32
  }
  func.func @transform_3(%arg0: i32, %arg1: i32, %arg2: memref<6xi32, #tpu.memory_space<smem>>) -> (i32, i32, i32) {
    %c0_i32 = arith.constant 0 : i32
    %c0_i32_0 = arith.constant 0 : i32
    return %arg0, %arg1, %c0_i32 : i32, i32, i32
  }
  func.func @transform_4(%arg0: i32, %arg1: i32, %arg2: memref<6xi32, #tpu.memory_space<smem>>) -> (i32, i32, i32) {
    %c0_i32 = arith.constant 0 : i32
    %c0_i32_0 = arith.constant 0 : i32
    return %arg0, %arg1, %c0_i32 : i32, i32, i32
  }
}

</mosaic_0001>

<llo_original>
// kernel: tpu_custom_call.1
$region0: #{tpu_custom_call.1}
  #allocation0 [shape = 'u32[]', space=smem, size = 0x4, offset = 0x4, fixed_abs, tag = 'smem constant byte address 0x4 - core index']
  #allocation1 [shape = 'u32[144,128]{1,0:T(1,128)}', space=vmem, size = 0x12000, scoped, tag = 'internal scratch']
  #allocation2 [shape = 's32[1]{0}', space=sflag, size = 0x4, scoped, tag = 'scoped memory for tpu_custom_call.1']
  #allocation3 [shape = 'u8[512]{0}', space=smem, size = 0x200, scoped, tag = 'prefetched SMEM operand 0']
  %s0 = inlined_call_operand.vmem [shape: s32[6], index: 0, kind: input, shape index: {}]
  %s1 = inlined_call_operand.vmem [shape: f32[2,16,32], index: 1, kind: input, shape index: {}]
  %s2 = inlined_call_operand.hbm [shape: f32[2,16,128], index: 2, kind: input, shape index: {}]
  %s3 = inlined_call_operand.vmem [shape: f32[2,16,4], index: 3, kind: input, shape index: {}]
  %s4 = inlined_call_operand.hbm [shape: f32[2,16,32], index: 4, kind: output, shape index: {0}]
  %s5 = inlined_call_operand.hbm [shape: f32[2,16,128], index: 5, kind: output, shape index: {1}]
  %6 = xla_tuple %s4, %s5
  %s7 = sld [smem:[#allocation0]]
  $region57: #{tpu_custom_call.1} parent=0
    _
  %s9 = ssub.s32 1, %s7
  %s10 = scalar_select 0, %s9, %s7
  %s11 = sshll.u32 %s0, 4
  %s12 = int_to_ptr.vmem [resolvable:$true] %s11
  %14 = dma.vmem_to_smem %s12, 16, [#allocation3], [#allocation2]
  %15 = dma.done [#allocation2], 16
  %16 = sfence
  $region1: #{tpu_custom_call.1} parent=0
    #allocation4 [shape = 'u8[16384]{0}', space=vmem, size = 0x4000, scoped, tag = 'input window, operand 2']
    #allocation5 [shape = 's32[2]{0}', space=sflag, size = 0x8, scoped, tag = 'scoped memory for tpu_custom_call.1']
    #allocation6 [shape = 's32[2]{0}', space=sflag, size = 0x8, scoped, tag = 'scoped memory for tpu_custom_call.1']
    #allocation7 [shape = 'u8[16384]{0}', space=vmem, size = 0x4000, scoped, tag = 'output window, operand 0']
    #allocation8 [shape = 'u8[16384]{0}', space=vmem, size = 0x4000, scoped, tag = 'output window, operand 1']
    #allocation9 [shape = 's32[2]{0}', space=sflag, size = 0x8, scoped, tag = 'scoped memory for tpu_custom_call.1']
    %17 = vsyncpa [#allocation5], 0
    %s18 = scalar_lea.sflag [#allocation5], 1
    %19 = vsyncpa %s18, 0
    %20 = vsyncpa [#allocation6], 0
    %s21 = scalar_lea.sflag [#allocation6], 1
    %22 = vsyncpa %s21, 0
    %23 = vsyncpa [#allocation9], 0
    %s24 = scalar_lea.sflag [#allocation9], 1
    %25 = vsyncpa %s24, 0
    loop: start=0, step=1, limit=4
    $region2: #{tpu_custom_call.1} parent=1 // loop_pre_header
      _
    $region3: #{tpu_custom_call.1} parent=1 // loop_header
      %s27 = sphi 0, %s31
      %p28 = scmp.ge.s32.totalorder %s27, 4
      %s34 = sphi 0, %s46
      %s35 = sphi 0, %s42
      %s36 = sphi 0, %s34
      %s37 = sphi 0, %s35
      %s38 = sphi 0, %s36
      %s39 = sphi 0, %s37
      %s51 = sphi 0, %s53
      %s54 = sphi 0, %s51
      %s55 = sphi 0, %s54
      %s71 = sphi 0, %s55
      %s79 = sphi 0, %s81
      %s82 = sphi 0, %s79
      %s83 = sphi 0, %s82
      %s99 = sphi 0, %s83
      %s107 = sphi 0, %s109
      %s110 = sphi 0, %s107
      %s111 = sphi 0, %s110
      %s127 = sphi 0, %s111
      %s135 = sphi 0, %s137
      %s138 = sphi 0, %s135
      %s139 = sphi 0, %s138
      %s155 = sphi 0, %s139
      %s163 = sphi 0, %s165
      %s166 = sphi 0, %s163
      %s167 = sphi 0, %s166
      %s183 = sphi 0, %s167
    $region4: #{tpu_custom_call.1} parent=1 // loop_header_branch
      %30 = sbr.rel (%p28) target = $region8
    $region5: #{tpu_custom_call.1} parent=1 // loop_body
      %s32 = ssub.s32 %s27, 1
      %s33 = ssub.s32 %s27, 2
      %s40 = sadd.s32 1, %s35
      %p41 = scmp.ge.s32.totalorder %s40, 1
      %s42 = scalar_select %p41, 0, %s40
      %s43 = sadd.s32 1, %s34
      %s44 = scalar_select %p41, %s43, %s34
      %p45 = scmp.ge.s32.totalorder %s44, 2
      %s46 = scalar_select %p45, 0, %s44
      %s47 = ssub.s32 %s34, %s46
      %s48 = ssub.s32 %s35, %s42
      %s49 = sor.u32 %s47, %s48
      %p50 = scmp.eq.s32.totalorder %s49, 0
      %s52 = sadd.s32 %s51, 1
      %s53 = scalar_select %p50, %s51, %s52
      %p56 = pneg %p50
      %p57 = scmp.eq.s32.totalorder %s27, 1
      %p58 = por %p56, %p57
      %p59 = scmp.ne.s32.totalorder %s51, %s54
      %p60 = scmp.eq.s32.totalorder %s27, 0
      %p61 = por %p59, %p60
      %p62 = scmp.ne.s32.totalorder %s51, %s54
      %p63 = scmp.eq.s32.totalorder %s32, 1
      %p64 = por %p62, %p63
      %p65 = scmp.ne.s32.totalorder %s54, %s55
      %p66 = scmp.eq.s32.totalorder %s32, 0
      %p67 = por %p65, %p66
      %p68 = scmp.ne.s32.totalorder %s54, %s55
      %p69 = scmp.eq.s32.totalorder %s33, 1
      %p70 = por %p68, %p69
      %p72 = scmp.ne.s32.totalorder %s55, %s71
      %p73 = scmp.eq.s32.totalorder %s33, 0
      %p74 = por %p72, %p73
      %s75 = ssub.s32 %s34, %s46
      %s76 = ssub.s32 %s35, %s42
      %s77 = sor.u32 %s75, %s76
      %p78 = scmp.eq.s32.totalorder %s77, 0
      %s80 = sadd.s32 %s79, 1
      %s81 = scalar_select %p78, %s79, %s80
      %p84 = pneg %p78
      %p85 = scmp.eq.s32.totalorder %s27, 1
      %p86 = por %p84, %p85
      %p87 = scmp.ne.s32.totalorder %s79, %s82
      %p88 = scmp.eq.s32.totalorder %s27, 0
      %p89 = por %p87, %p88
      %p90 = scmp.ne.s32.totalorder %s79, %s82
      %p91 = scmp.eq.s32.totalorder %s32, 1
      %p92 = por %p90, %p91
      %p93 = scmp.ne.s32.totalorder %s82, %s83
      %p94 = scmp.eq.s32.totalorder %s32, 0
      %p95 = por %p93, %p94
      %p96 = scmp.ne.s32.totalorder %s82, %s83
      %p97 = scmp.eq.s32.totalorder %s33, 1
      %p98 = por %p96, %p97
      %p100 = scmp.ne.s32.totalorder %s83, %s99
      %p101 = scmp.eq.s32.totalorder %s33, 0
      %p102 = por %p100, %p101
      %s103 = ssub.s32 %s34, %s46
      %s104 = ssub.s32 %s35, %s42
      %s105 = sor.u32 %s103, %s104
      %p106 = scmp.eq.s32.totalorder %s105, 0
      %s108 = sadd.s32 %s107, 1
      %s109 = scalar_select %p106, %s107, %s108
      %p112 = pneg %p106
      %p113 = scmp.eq.s32.totalorder %s27, 1
      %p114 = por %p112, %p113
      %p115 = scmp.ne.s32.totalorder %s107, %s110
      %p116 = scmp.eq.s32.totalorder %s27, 0
      %p117 = por %p115, %p116
      %p118 = scmp.ne.s32.totalorder %s107, %s110
      %p119 = scmp.eq.s32.totalorder %s32, 1
      %p120 = por %p118, %p119
      %p121 = scmp.ne.s32.totalorder %s110, %s111
      %p122 = scmp.eq.s32.totalorder %s32, 0
      %p123 = por %p121, %p122
      %p124 = scmp.ne.s32.totalorder %s110, %s111
      %p125 = scmp.eq.s32.totalorder %s33, 1
      %p126 = por %p124, %p125
      %p128 = scmp.ne.s32.totalorder %s111, %s127
      %p129 = scmp.eq.s32.totalorder %s33, 0
      %p130 = por %p128, %p129
      %s131 = ssub.s32 %s34, %s46
      %s132 = ssub.s32 %s35, %s42
      %s133 = sor.u32 %s131, %s132
      %p134 = scmp.eq.s32.totalorder %s133, 0
      %s136 = sadd.s32 %s135, 1
      %s137 = scalar_select %p134, %s135, %s136
      %p140 = pneg %p134
      %p141 = scmp.eq.s32.totalorder %s27, 1
      %p142 = por %p140, %p141
      %p143 = scmp.ne.s32.totalorder %s135, %s138
      %p144 = scmp.eq.s32.totalorder %s27, 0
      %p145 = por %p143, %p144
      %p146 = scmp.ne.s32.totalorder %s135, %s138
      %p147 = scmp.eq.s32.totalorder %s32, 1
      %p148 = por %p146, %p147
      %p149 = scmp.ne.s32.totalorder %s138, %s139
      %p150 = scmp.eq.s32.totalorder %s32, 0
      %p151 = por %p149, %p150
      %p152 = scmp.ne.s32.totalorder %s138, %s139
      %p153 = scmp.eq.s32.totalorder %s33, 1
      %p154 = por %p152, %p153
      %p156 = scmp.ne.s32.totalorder %s139, %s155
      %p157 = scmp.eq.s32.totalorder %s33, 0
      %p158 = por %p156, %p157
      %s159 = ssub.s32 %s34, %s46
      %s160 = ssub.s32 %s35, %s42
      %s161 = sor.u32 %s159, %s160
      %p162 = scmp.eq.s32.totalorder %s161, 0
      %s164 = sadd.s32 %s163, 1
      %s165 = scalar_select %p162, %s163, %s164
      %p168 = pneg %p162
      %p169 = scmp.eq.s32.totalorder %s27, 1
      %p170 = por %p168, %p169
      %p171 = scmp.ne.s32.totalorder %s163, %s166
      %p172 = scmp.eq.s32.totalorder %s27, 0
      %p173 = por %p171, %p172
      %p174 = scmp.ne.s32.totalorder %s163, %s166
      %p175 = scmp.eq.s32.totalorder %s32, 1
      %p176 = por %p174, %p175
      %p177 = scmp.ne.s32.totalorder %s166, %s167
      %p178 = scmp.eq.s32.totalorder %s32, 0
      %p179 = por %p177, %p178
      %p180 = scmp.ne.s32.totalorder %s166, %s167
      %p181 = scmp.eq.s32.totalorder %s33, 1
      %p182 = por %p180, %p181
      %p184 = scmp.ne.s32.totalorder %s167, %s183
      %p185 = scmp.eq.s32.totalorder %s33, 0
      %p186 = por %p184, %p185
      %p187 = scmp.le.s32.totalorder 1, %s27
      %p188 = scmp.lt.s32.totalorder %s27, 3
      %p189 = pnand %p187, %p188
      %p190 = pneg %p189
      // Predicated region
      $region9: #{tpu_custom_call.1} parent=5 // pred_check
        _
      $region10: #{tpu_custom_call.1} parent=5 // pred_check_branch
        %192 = sbr.rel (%p189) target = $region12
      $region11: #{tpu_custom_call.1} parent=5 // pred_region
        %s193 = ssub.s32 %s27, 1
      $region12: #{tpu_custom_call.1} parent=5 // pred_fallthru
        _
      %p194 = scmp.lt.s32.totalorder %s27, 2
      // Predicated region
      $region13: #{tpu_custom_call.1} parent=5 // pred_check
        %p195 = pneg %p194
      $region14: #{tpu_custom_call.1} parent=5 // pred_check_branch
        %197 = sbr.rel (%p195) target = $region16
      $region15: #{tpu_custom_call.1} parent=5 // pred_region
        // Predicated region
        $region17: #{tpu_custom_call.1} parent=15 // pred_check
          %p198 = pneg %p61
        $region18: #{tpu_custom_call.1} parent=15 // pred_check_branch
          %200 = sbr.rel (%p198) target = $region20
        $region19: #{tpu_custom_call.1} parent=15 // pred_region
          %s201 = smul.u32 2, %s35
          %p202 = scmp.lt.s32.totalorder %s34, 1
          %s203 = scalar_select %p202, %s34, 1
          %p204 = scmp.lt.s32.totalorder %s201, 1
          %s205 = scalar_select %p204, %s201, 1
          %s206 = smul.addr %s203, 2
          %s207 = sadd.s32 %s205, %s206
          %s208 = smul.addr %s207, 8
          %s209 = scalar_lea.vmem %s1, %s208
          %s210 = smul.u32 2, %s35
        $region20: #{tpu_custom_call.1} parent=15 // pred_fallthru
          _
        // Predicated region
        $region21: #{tpu_custom_call.1} parent=15 // pred_check
          %p211 = pneg %p89
        $region22: #{tpu_custom_call.1} parent=15 // pred_check_branch
          %213 = sbr.rel (%p211) target = $region24
        $region23: #{tpu_custom_call.1} parent=15 // pred_region
          %s214 = sand.u32 %s79, 1
          %s215 = scalar_lea.sflag [#allocation5], %s214
          %s216 = sand.u32 %s79, 1
          %s217 = smul.addr %s216, 16
          %s218 = scalar_lea.vmem [#allocation4], %s217
          %s219 = smul.u32 2, %s35
          %s221 = ssub.s32 256, 256
          %222 = vsyncadd %s215, %s221
          %s223 = smul.addr %s34, 2
          %s224 = sadd.s32 %s219, %s223
          %s225 = smul.addr %s224, 128
          %s226 = scalar_lea.hbm %s2, %s225
          %s227 = sshll.u32 %s218, 4
          %s228 = int_to_ptr.vmem [resolvable:$true] %s227
          %233 = dma.hbm_to_vmem [thread:$0]  %s226, 256, %s228, %s215, 128, 128, 8
        $region24: #{tpu_custom_call.1} parent=15 // pred_fallthru
          _
        // Predicated region
        $region25: #{tpu_custom_call.1} parent=15 // pred_check
          %p234 = pneg %p117
        $region26: #{tpu_custom_call.1} parent=15 // pred_check_branch
          %236 = sbr.rel (%p234) target = $region28
        $region27: #{tpu_custom_call.1} parent=15 // pred_region
          %s237 = smul.u32 2, %s35
          %p238 = scmp.lt.s32.totalorder %s34, 1
          %s239 = scalar_select %p238, %s34, 1
          %p240 = scmp.lt.s32.totalorder %s237, 1
          %s241 = scalar_select %p240, %s237, 1
          %s242 = smul.addr %s239, 2
          %s243 = sadd.s32 %s241, %s242
          %s244 = smul.addr %s243, 8
          %s245 = scalar_lea.vmem %s3, %s244
          %s246 = smul.u32 2, %s35
        $region28: #{tpu_custom_call.1} parent=15 // pred_fallthru
          _
      $region16: #{tpu_custom_call.1} parent=5 // pred_fallthru
        _
      %p247 = scmp.le.s32.totalorder 1, %s27
      %p248 = scmp.lt.s32.totalorder %s27, 3
      %p249 = pnand %p247, %p248
      %p250 = pneg %p249
      // Predicated region
      $region29: #{tpu_custom_call.1} parent=5 // pred_check
        _
      $region30: #{tpu_custom_call.1} parent=5 // pred_check_branch
        %252 = sbr.rel (%p249) target = $region32
      $region31: #{tpu_custom_call.1} parent=5 // pred_region
        %s253 = ssub.s32 %s27, 1
        %s254 = sand.u32 %s82, 1
        %s255 = scalar_lea.sflag [#allocation5], %s254
        %s256 = sand.u32 %s82, 1
        %s257 = smul.addr %s256, 16
        %s258 = scalar_lea.vmem [#allocation4], %s257
        // Predicated region
        $region33: #{tpu_custom_call.1} parent=31 // pred_check
          %p259 = pneg %p95
        $region34: #{tpu_custom_call.1} parent=31 // pred_check_branch
          %261 = sbr.rel (%p259) target = $region36
        $region35: #{tpu_custom_call.1} parent=31 // pred_region
          %262 = dma.done %s255, 256
        $region36: #{tpu_custom_call.1} parent=31 // pred_fallthru
          _
        %s263 = smul.u32 2, %s37
        %p264 = scmp.lt.s32.totalorder %s36, 1
        %s265 = scalar_select %p264, %s36, 1
        %p266 = scmp.lt.s32.totalorder %s263, 1
        %s267 = scalar_select %p266, %s263, 1
        %s268 = smul.addr %s265, 2
        %s269 = sadd.s32 %s267, %s268
        %s270 = smul.addr %s269, 8
        %s271 = scalar_lea.vmem %s1, %s270
        %p272 = pneg %p67
        %p273 = pneg %p64
        %s274 = sand.u32 %s82, 1
        %s275 = scalar_lea.sflag [#allocation5], %s274
        %s276 = sand.u32 %s82, 1
        %s277 = smul.addr %s276, 16
        %s278 = scalar_lea.vmem [#allocation4], %s277
        %p279 = pneg %p95
        %p280 = pneg %p92
        %s281 = smul.u32 2, %s37
        %p282 = scmp.lt.s32.totalorder %s36, 1
        %s283 = scalar_select %p282, %s36, 1
        %p284 = scmp.lt.s32.totalorder %s281, 1
        %s285 = scalar_select %p284, %s281, 1
        %s286 = smul.addr %s283, 2
        %s287 = sadd.s32 %s285, %s286
        %s288 = smul.addr %s287, 8
        %s289 = scalar_lea.vmem %s3, %s288
        %p290 = pneg %p123
        %p291 = pneg %p120
        %p292 = pneg %p151
        %p293 = pneg %p148
        %s294 = sand.u32 %s138, 1
        %s295 = scalar_lea.sflag [#allocation6], %s294
        %s296 = sand.u32 %s138, 1
        %s297 = smul.addr %s296, 16
        %s298 = scalar_lea.vmem [#allocation7], %s297
        %p299 = pneg %p179
        %p300 = pneg %p176
        %s301 = sand.u32 %s166, 1
        %s302 = scalar_lea.sflag [#allocation9], %s301
        %s303 = sand.u32 %s166, 1
        %s304 = smul.addr %s303, 16
        %s305 = scalar_lea.vmem [#allocation8], %s304
        %s306 = smul.u32 2, %s37
        %p307 = scmp.lt.s32.totalorder %s36, 1
        %s308 = scalar_select %p307, %s36, 1
        %p309 = scmp.lt.s32.totalorder %s306, 1
        %s310 = scalar_select %p309, %s306, 1
        %s311 = smul.addr %s308, 2
        %s312 = sadd.s32 %s310, %s311
        %s313 = smul.addr %s312, 8
        %s314 = scalar_lea.vmem %s1, %s313
        %s315 = smul.u32 2, %s37
        %s316 = smul.u32 2, %s37
        %s317 = smul.u32 2, %s37
        %p318 = scmp.lt.s32.totalorder %s36, 1
        %s319 = scalar_select %p318, %s36, 1
        %p320 = scmp.lt.s32.totalorder %s317, 1
        %s321 = scalar_select %p320, %s317, 1
        %s322 = smul.addr %s319, 2
        %s323 = sadd.s32 %s321, %s322
        %s324 = smul.addr %s323, 8
        %s325 = scalar_lea.vmem %s3, %s324
        %s326 = smul.u32 2, %s37
        %s327 = smul.u32 2, %s37
        %s328 = smul.u32 2, %s37
        %s329 = smul.u32 %s36, 3
        %s330 = sld [smem:[#allocation3 + %s329]]
        %s331 = scvt.s32.f32 %s330
        %s332 = sadd.s32 %s329, 1
        %s333 = sld [smem:[#allocation3 + %s332]]
        %s334 = scvt.s32.f32 %s333
        %s335 = sadd.s32 %s329, 2
        %s336 = sld [smem:[#allocation3 + %s335]]
        %s337 = ssub.f32 %s331, 1.0
        %s338 = ssub.f32 %s334, 1.0
        %v339 = vlaneseq
        %v340 = vshrl.u32 %v339, 7
        %v341 = vadd.s32 %v340, 8
        %s342 = smul.u32 %s37, 16
        %v343 = vstv %s342
        %v344 = vadd.s32 %v340, %v343
        %v345 = vadd.s32 %v341, %v343
        %v346 = vstv %s336
        %vm347 = vcmp.lt.s32.totalorder %v344, %v346
        %vm348 = vcmp.lt.s32.totalorder %v345, %v346
        %v349 = vld [vmem:[%s314] sm:$0xff]
        %v350 = vld [vmem:[%s314 + $0x8] sm:$0xff]
        %vm351 = vcmask 261120
        %v352 = vsel %vm351, %v349, -inf
        %353 = vmax.xlane.f32.xlu0 %v352
        %v354 = vpop.xlane.xlu0 %353
        %v355 = vsel %vm351, %v350, -inf
        %356 = vmax.xlane.f32.xlu0 %v355
        %v357 = vpop.xlane.xlu0 %356
        %v358 = vsub.f32 %v349, %v354
        %v359 = vsub.f32 %v350, %v357
        %v360 = vmul.f32 %v358, 1.442695
        %v361 = vpow.pop %v360
        %v362 = vmul.f32 %v359, 1.442695
        %v363 = vpow.pop %v362
        %v364 = vsel %vm351, %v361, 0.0
        %365 = vadd.xlane.f32.xlu0 %v364
        %v366 = vpop.xlane.xlu0 %365
        %v367 = vsel %vm351, %v363, 0.0
        %368 = vadd.xlane.f32.xlu0 %v367
        %v369 = vpop.xlane.xlu0 %368
        %v370 = vrcp.pop %v366
        %v371 = vrcp.pop %v369
        %v372 = vmul.f32 %v361, %v370
        %v373 = vmul.f32 %v363, %v371
        %v374 = vsel %vm347, 1, 0
        %v375 = vsel %vm348, 1, 0
        %vm376 = vcmp.eq.s32.totalorder %v374, 1
        %vm377 = vcmp.eq.s32.totalorder %v375, 1
        %v378 = vsel %vm376, %v372, 0.0
        %v379 = vsel %vm377, %v373, 0.0
        %380 = vst.msk [vmem:[%s298] sm:$0xff] %vm351, %v378
        %381 = vst.msk [vmem:[%s298 + $0x8] sm:$0xff] %vm351, %v379
        %v382 = vld [vmem:[%s325] sm:$0xff]
        %v383 = vld [vmem:[%s325 + $0x8] sm:$0xff]
        %386 = vrot.lane.b32.xlu0 %v382, 2
        %v387 = vpop.permute.xlu0 %386
        %388 = vrot.lane.b32.xlu0 %v383, 2
        %v389 = vpop.permute.xlu0 %388
        %v392 = vsub.f32 %v382, %v387
        %v393 = vsub.f32 %v383, %v389
        %v394 = vadd.f32 %v392, 1.0
        %v395 = vadd.f32 %v393, 1.0
        %v396 = vmul.f32 %v394, 0.5
        %v397 = vmul.f32 %v395, 0.5
        %400 = vrot.lane.b32.xlu0 %v396, 126
        %v401 = vpop.permute.xlu0 %400
        %402 = vrot.lane.b32.xlu0 %v397, 126
        %v403 = vpop.permute.xlu0 %402
        %v406 = vadd.f32 %v382, %v401
        %v407 = vadd.f32 %v383, %v403
        %v408 = vlaneseq
        %v409 = vand.u32 %v408, 127
        %vm410 = vcmp.lt.s32.totalorder %v409, 0
        %v411 = vsub.s32 0, %v409
        %v412 = vsel %vm410, %v411, %v409
        %v413 = vshrl.u32 %v412, 2
        %v414 = vand.u32 %v412, 3
        %v415 = vsub.s32 0, %v414
        %v416 = vsel %vm410, %v415, %v414
        %vm417 = vcmp.ne.s32.totalorder %v416, 0
        %vm418 = vcmp.lt.s32.totalorder %v416, 0
        %vm419 = vmand %vm418, %vm417
        %v420 = vadd.s32 %v416, 4
        %v421 = vsel %vm419, %v420, %v416
        %vm422 = vcmp.lt.s32.totalorder %v421, 2
        %vm423 = vcmp.lt.s32.totalorder %v421, 0
        %v424 = vsub.s32 0, %v421
        %v425 = vsel %vm423, %v424, %v421
        %v426 = vshrl.u32 %v425, 1
        %v427 = vand.u32 %v425, 1
        %v428 = vsub.s32 0, %v427
        %v429 = vsel %vm423, %v428, %v427
        %vm430 = vcmp.ne.s32.totalorder %v429, 0
        %vm431 = vcmp.lt.s32.totalorder %v429, 0
        %vm432 = vmand %vm431, %vm430
        %v433 = vadd.s32 %v429, 2
        %v434 = vsel %vm432, %v433, %v429
        %vm435 = vcmp.eq.s32.totalorder %v434, 0
        %v436 = vsel %vm422, 0.1, 0.2
        %v437 = vld [vmem:[%s258] sm:$0xff]
        %v438 = vld [vmem:[%s258 + $0x8] sm:$0xff]
        %v439 = vmul.f32 %v437, %v436
        %v440 = vmul.f32 %v438, %v436
        %441 = vrot.lane.b32.xlu0 %v439, 2
        %v442 = vpop.permute.xlu0 %441
        %443 = vrot.lane.b32.xlu0 %v440, 2
        %v444 = vpop.permute.xlu0 %443
        %445 = vrot.lane.b32.xlu0 %v439, 126
        %v446 = vpop.permute.xlu0 %445
        %447 = vrot.lane.b32.xlu0 %v440, 126
        %v448 = vpop.permute.xlu0 %447
        %v449 = vsel %vm422, 1, 0
        %vm450 = vcmp.eq.s32.totalorder %v449, 1
        %v451 = vsel %vm450, %v439, %v442
        %v452 = vsel %vm450, %v440, %v444
        %v453 = vsel %vm450, %v446, %v439
        %v454 = vsel %vm450, %v448, %v440
        %v455 = vmin.f32 %v453, 4.1351666
        %v456 = vmin.f32 %v454, 4.1351666
        %v457 = vmul.f32 %v455, 1.442695
        %v458 = vpow.pop %v457
        %v459 = vmul.f32 %v456, 1.442695
        %v460 = vpow.pop %v459
        %v461 = vsel %vm435, 1, 0
        %vm462 = vcmp.eq.s32.totalorder %v461, 1
        %464 = vset.pattern.permute.xlu0 2
        %465 = vperm.xlu0 %464, %v394
        %v466 = vpop.permute.xlu0 %465
        %469 = vset.pattern.permute.xlu0 2
        %470 = vperm.xlu0 %469, %v395
        %v471 = vpop.permute.xlu0 %470
        %473 = vset.pattern.permute.xlu0 3
        %474 = vperm.xlu0 %473, %v394
        %v475 = vpop.permute.xlu0 %474
        %477 = vset.pattern.permute.xlu0 3
        %478 = vperm.xlu0 %477, %v395
        %v479 = vpop.permute.xlu0 %478
        %v481 = vsel %vm462, %v466, %v475
        %v482 = vsel %vm462, %v471, %v479
        %484 = vset.pattern.permute.xlu0 0
        %485 = vperm.xlu0 %484, %v406
        %v486 = vpop.permute.xlu0 %485
        %489 = vset.pattern.permute.xlu0 0
        %490 = vperm.xlu0 %489, %v407
        %v491 = vpop.permute.xlu0 %490
        %493 = vset.pattern.permute.xlu0 1
        %494 = vperm.xlu0 %493, %v406
        %v495 = vpop.permute.xlu0 %494
        %497 = vset.pattern.permute.xlu0 1
        %498 = vperm.xlu0 %497, %v407
        %v499 = vpop.permute.xlu0 %498
        %v501 = vsel %vm462, %v486, %v495
        %v502 = vsel %vm462, %v491, %v499
        %v503 = vsel %vm422, -0.5, 0.5
        %v504 = vsel %vm422, 0.0, -1.0
        %v505 = vstv %s337
        %v506 = vstv %s338
        %v507 = vsel %vm435, %v505, %v506
        %v508 = vmul.f32 %v451, %v481
        %v509 = vmul.f32 %v452, %v482
        %v510 = vadd.f32 %v501, %v508
        %v511 = vadd.f32 %v502, %v509
        %v512 = vmul.f32 %v458, %v481
        %v513 = vmul.f32 %v460, %v482
        %v514 = vmul.f32 %v503, %v512
        %v515 = vmul.f32 %v503, %v513
        %v516 = vadd.f32 %v510, %v514
        %v517 = vadd.f32 %v511, %v515
        %v518 = vadd.f32 %v516, %v504
        %v519 = vadd.f32 %v517, %v504
        %v520 = vmax.f32 %v518, 0.0
        %v521 = vmax.f32 %v519, 0.0
        %v522 = vmin.f32 %v507, %v520
        %v523 = vmin.f32 %v507, %v521
        %v524 = vsel %vm376, %v522, 0.0
        %v525 = vsel %vm377, %v523, 0.0
        %526 = vst [vmem:[%s305] sm:$0xff] %v524
        %527 = vst [vmem:[%s305 + $0x8] sm:$0xff] %v525
        %s528 = sand.u32 %s138, 1
        %s529 = scalar_lea.sflag [#allocation6], %s528
        %s530 = sand.u32 %s138, 1
        %s531 = smul.addr %s530, 16
        %s532 = scalar_lea.vmem [#allocation7], %s531
        %s533 = sand.u32 %s166, 1
        %s534 = scalar_lea.sflag [#allocation9], %s533
        %s535 = sand.u32 %s166, 1
        %s536 = smul.addr %s535, 16
        %s537 = scalar_lea.vmem [#allocation8], %s536
        // Predicated region
        $region37: #{tpu_custom_call.1} parent=31 // pred_check
          %p538 = pneg %p148
        $region38: #{tpu_custom_call.1} parent=31 // pred_check_branch
          %540 = sbr.rel (%p538) target = $region40
        $region39: #{tpu_custom_call.1} parent=31 // pred_region
          %s541 = smul.u32 2, %s37
          %s543 = ssub.s32 256, 256
          %544 = vsyncadd %s529, %s543
          %s545 = smul.addr %s36, 2
          %s546 = sadd.s32 %s541, %s545
          %s547 = smul.addr %s546, 128
          %s548 = scalar_lea.hbm %s4, %s547
          %s549 = sshll.u32 %s532, 4
          %s550 = int_to_ptr.vmem [resolvable:$true] %s549
          %555 = dma.vmem_to_hbm [thread:$0]  %s550, 256, %s548, %s529, 128, 128, 8
        $region40: #{tpu_custom_call.1} parent=31 // pred_fallthru
          _
        // Predicated region
        $region41: #{tpu_custom_call.1} parent=31 // pred_check
          %p556 = pneg %p176
        $region42: #{tpu_custom_call.1} parent=31 // pred_check_branch
          %558 = sbr.rel (%p556) target = $region44
        $region43: #{tpu_custom_call.1} parent=31 // pred_region
          %s559 = smul.u32 2, %s37
          %s561 = ssub.s32 256, 256
          %562 = vsyncadd %s534, %s561
          %s563 = smul.addr %s36, 2
          %s564 = sadd.s32 %s559, %s563
          %s565 = smul.addr %s564, 128
          %s566 = scalar_lea.hbm %s5, %s565
          %s567 = sshll.u32 %s537, 4
          %s568 = int_to_ptr.vmem [resolvable:$true] %s567
          %573 = dma.vmem_to_hbm [thread:$0]  %s568, 256, %s566, %s534, 128, 128, 8
        $region44: #{tpu_custom_call.1} parent=31 // pred_fallthru
          _
      $region32: #{tpu_custom_call.1} parent=5 // pred_fallthru
        _
      %p574 = scmp.le.s32.totalorder 2, %s27
      // Predicated region
      $region45: #{tpu_custom_call.1} parent=5 // pred_check
        %p575 = pneg %p574
      $region46: #{tpu_custom_call.1} parent=5 // pred_check_branch
        %577 = sbr.rel (%p575) target = $region48
      $region47: #{tpu_custom_call.1} parent=5 // pred_region
        %s578 = ssub.s32 %s27, 2
        // Predicated region
        $region49: #{tpu_custom_call.1} parent=47 // pred_check
          %p579 = pneg %p154
        $region50: #{tpu_custom_call.1} parent=47 // pred_check_branch
          %581 = sbr.rel (%p579) target = $region52
        $region51: #{tpu_custom_call.1} parent=47 // pred_region
          %s582 = sand.u32 %s139, 1
          %s583 = scalar_lea.sflag [#allocation6], %s582
          %s584 = sand.u32 %s139, 1
          %s585 = smul.addr %s584, 16
          %s586 = scalar_lea.vmem [#allocation7], %s585
          %587 = dma.done %s583, 256
        $region52: #{tpu_custom_call.1} parent=47 // pred_fallthru
          _
        // Predicated region
        $region53: #{tpu_custom_call.1} parent=47 // pred_check
          %p588 = pneg %p182
        $region54: #{tpu_custom_call.1} parent=47 // pred_check_branch
          %590 = sbr.rel (%p588) target = $region56
        $region55: #{tpu_custom_call.1} parent=47 // pred_region
          %s591 = sand.u32 %s167, 1
          %s592 = scalar_lea.sflag [#allocation9], %s591
          %s593 = sand.u32 %s167, 1
          %s594 = smul.addr %s593, 16
          %s595 = scalar_lea.vmem [#allocation8], %s594
          %596 = dma.done %s592, 256
        $region56: #{tpu_custom_call.1} parent=47 // pred_fallthru
          _
      $region48: #{tpu_custom_call.1} parent=5 // pred_fallthru
        _
    $region6: #{tpu_custom_call.1} parent=1 // loop_footer
      %s31 = sadd.s32 1, %s27
    $region7: #{tpu_custom_call.1} parent=1 // loop_footer_branch
      %26 = sbr.rel target = $region3
    $region8: #{tpu_custom_call.1} parent=1 // loop_exit
      _
    %597 = vsyncpa [#allocation5], 1
    %s598 = scalar_lea.sflag [#allocation5], 1
    %599 = vsyncpa %s598, 1
    %600 = vsyncpa [#allocation6], 1
    %s601 = scalar_lea.sflag [#allocation6], 1
    %602 = vsyncpa %s601, 1
    %603 = vsyncpa [#allocation9], 1
    %s604 = scalar_lea.sflag [#allocation9], 1
    %605 = vsyncpa %s604, 1

</llo_original>
